<compile_context>
chip_gen: v7x
topology: tpu7x:2x2x1
jax: 0.10.0
libtpu: 0.0.40
codegen_flags: <defaults>
</compile_context>

<pallas_src>
import math
import functools

import jax
import jax.numpy as jnp
from jax.experimental import pallas as pl
from jax.experimental.pallas import tpu as pltpu


def _round_up(x: int, m: int) -> int:
    return ((x + m - 1) // m) * m


# ---------------------------------------------------------------------------
# Kernel 1: tiled linear layer  y = x @ W + b
# ---------------------------------------------------------------------------
def _linear_kernel(x_ref, w_ref, b_ref, o_ref):
    o_ref[...] = (
        jnp.dot(x_ref[...], w_ref[...], preferred_element_type=jnp.float32)
        + b_ref[...]
    ).astype(o_ref.dtype)


def linear_pallas(x2d, w, b, *, max_tm=256):
    """x2d: (n, d_in); w: (d_in, d_out); b: (d_out,) -> (n, d_out) float32."""
    n, d_in = x2d.shape
    d_out = w.shape[1]

    # Row tile: as large as VMEM sensibly allows; pad rows rather than assert.
    tm = min(max_tm, _round_up(n, 8))
    n_pad = _round_up(n, tm)
    if n_pad != n:
        x2d = jnp.pad(x2d, ((0, n_pad - n), (0, 0)))

    # Explicit VMEM budget from tile sizes (double-buffered x/out row tiles,
    # grid-invariant weight + bias) instead of relying on the scoped default.
    vmem_bytes = 4 * (2 * tm * (d_in + d_out) + 2 * (d_in * d_out + d_out))
    vmem_bytes = int(min(max(vmem_bytes + (2 << 20), 16 << 20), 64 << 20))

    cost = pl.CostEstimate(
        flops=2 * n_pad * d_in * d_out,
        transcendentals=0,
        bytes_accessed=4 * (n_pad * d_in + d_in * d_out + d_out + n_pad * d_out),
    )

    out = pl.pallas_call(
        _linear_kernel,
        out_shape=jax.ShapeDtypeStruct((n_pad, d_out), jnp.float32),
        grid_spec=pltpu.PrefetchScalarGridSpec(
            num_scalar_prefetch=0,
            grid=(n_pad // tm,),
            in_specs=[
                pl.BlockSpec((tm, d_in), lambda i: (i, 0)),     # x row tile
                pl.BlockSpec((d_in, d_out), lambda i: (0, 0)),  # weight (grid-invariant)
                pl.BlockSpec((1, d_out), lambda i: (0, 0)),     # bias   (grid-invariant)
            ],
            out_specs=pl.BlockSpec((tm, d_out), lambda i: (i, 0)),
        ),
        compiler_params=pltpu.CompilerParams(
            dimension_semantics=("parallel",),
            vmem_limit_bytes=vmem_bytes,
        ),
        cost_estimate=cost,
    )(x2d, w, b.reshape(1, d_out))
    return out[:n]


# ---------------------------------------------------------------------------
# Kernel 2: per-(batch, head) scaled dot-product attention.
# ---------------------------------------------------------------------------
def _attention_kernel(q_ref, k_ref, v_ref, mask_ref, o_ref, attn_ref, *, sm_scale):
    q = q_ref[0, 0, :, :]          # (Lq, d_k)
    k = k_ref[0, 0, :, :]          # (Lk, d_k)
    v = v_ref[0, 0, :, :]          # (Lk, d_k)

    # scores = Q @ K^T / sqrt(d_k)  -- contract on d_k, no explicit transpose.
    scores = jax.lax.dot_general(
        q, k, (((1,), (1,)), ((), ())), preferred_element_type=jnp.float32
    ) * sm_scale

    # masked_fill(mask == 0, -1e9)
    scores = jnp.where(mask_ref[0, :, :] == 0.0, jnp.float32(-1e9), scores)

    # Numerically-stable softmax along the key (lane) axis.
    m = jnp.max(scores, axis=-1, keepdims=True)
    p = jnp.exp(scores - m)
    probs = p / jnp.sum(p, axis=-1, keepdims=True)

    attn_ref[0, 0, :, :] = probs.astype(attn_ref.dtype)
    o_ref[0, 0, :, :] = jnp.dot(
        probs, v, preferred_element_type=jnp.float32
    ).astype(o_ref.dtype)


def multi_headed_attention(query, key, value, params, *, h, mask=None):
    """Forward pass of the PyTorch MultiHeadedAttention module.

    query: (N, Lq, d_model); key/value: (N, Lk, d_model)
    params: dict of wq,bq,wk,bk,wv,bv,wo,bo; w* are (d_model, d_model)
    mask: None, (N, 1, Lk) or (N, Lq, Lk)
    Returns (attn_out (N, Lq, d_model), attn_weights (N, h, Lq, Lk)).
    """
    N, Lq, d_model = query.shape
    Lk = key.shape[1]
    assert d_model % h == 0
    d_k = d_model // h

    # Input projections (Pallas linear kernel, token-tiled).
    q_p = linear_pallas(query.reshape(N * Lq, d_model), params["wq"], params["bq"])
    k_p = linear_pallas(key.reshape(N * Lk, d_model), params["wk"], params["bk"])
    v_p = linear_pallas(value.reshape(N * Lk, d_model), params["wv"], params["bv"])

    # Split heads -> (N, h, L, d_k): each grid step sees full (L, d_k) tiles,
    # so block last-two dims equal the array dims (no (8,128) violations).
    q_h = q_p.reshape(N, Lq, h, d_k).transpose(0, 2, 1, 3)
    k_h = k_p.reshape(N, Lk, h, d_k).transpose(0, 2, 1, 3)
    v_h = v_p.reshape(N, Lk, h, d_k).transpose(0, 2, 1, 3)

    if mask is None:
        mask3 = jnp.ones((N, Lq, Lk), dtype=jnp.float32)
    else:
        mask3 = jnp.broadcast_to(
            mask.astype(jnp.float32).reshape(N, -1, Lk), (N, Lq, Lk)
        )

    vmem_bytes = 4 * 2 * (2 * Lq * d_k + 2 * Lk * d_k + 3 * Lq * Lk)
    vmem_bytes = int(min(max(vmem_bytes + (2 << 20), 16 << 20), 64 << 20))

    cost = pl.CostEstimate(
        flops=4 * N * h * Lq * Lk * d_k,
        transcendentals=N * h * Lq * Lk,
        bytes_accessed=4
        * (N * h * (2 * Lq * d_k + 2 * Lk * d_k + Lq * Lk) + N * Lq * Lk),
    )

    attn_out_h, attn_w = pl.pallas_call(
        functools.partial(_attention_kernel, sm_scale=1.0 / math.sqrt(d_k)),
        out_shape=(
            jax.ShapeDtypeStruct((N, h, Lq, d_k), jnp.float32),
            jax.ShapeDtypeStruct((N, h, Lq, Lk), jnp.float32),
        ),
        grid_spec=pltpu.PrefetchScalarGridSpec(
            num_scalar_prefetch=0,
            grid=(N, h),
            in_specs=[
                pl.BlockSpec((1, 1, Lq, d_k), lambda b, hh: (b, hh, 0, 0)),
                pl.BlockSpec((1, 1, Lk, d_k), lambda b, hh: (b, hh, 0, 0)),
                pl.BlockSpec((1, 1, Lk, d_k), lambda b, hh: (b, hh, 0, 0)),
                pl.BlockSpec((1, Lq, Lk), lambda b, hh: (b, 0, 0)),
            ],
            out_specs=[
                pl.BlockSpec((1, 1, Lq, d_k), lambda b, hh: (b, hh, 0, 0)),
                pl.BlockSpec((1, 1, Lq, Lk), lambda b, hh: (b, hh, 0, 0)),
            ],
        ),
        compiler_params=pltpu.CompilerParams(
            dimension_semantics=("parallel", "parallel"),
            vmem_limit_bytes=vmem_bytes,
        ),
        cost_estimate=cost,
    )(q_h, k_h, v_h, mask3)

    # TODO(synk): nn.Dropout(p=0.1) on the attention weights is stochastic;
    # implemented here as eval-mode identity.

    # Merge heads and apply the output projection.
    merged = attn_out_h.transpose(0, 2, 1, 3).reshape(N * Lq, d_model)
    out = linear_pallas(merged, params["wo"], params["bo"]).reshape(N, Lq, d_model)
    return out, attn_w


# ---------------------------------------------------------------------------
# Pure-JAX reference for validation.
# ---------------------------------------------------------------------------
def _reference_mha(query, key, value, params, *, h, mask=None):
    N, Lq, d_model = query.shape
    Lk = key.shape[1]
    d_k = d_model // h
    hp = jax.lax.Precision.HIGHEST
    q = (jnp.dot(query, params["wq"], precision=hp) + params["bq"]).reshape(
        N, Lq, h, d_k).transpose(0, 2, 1, 3)
    k = (jnp.dot(key, params["wk"], precision=hp) + params["bk"]).reshape(
        N, Lk, h, d_k).transpose(0, 2, 1, 3)
    v = (jnp.dot(value, params["wv"], precision=hp) + params["bv"]).reshape(
        N, Lk, h, d_k).transpose(0, 2, 1, 3)
    scores = jnp.einsum("nhqd,nhkd->nhqk", q, k, precision=hp) / math.sqrt(d_k)
    if mask is not None:
        m = mask.reshape(N, 1, -1, Lk)
        scores = jnp.where(m == 0, -1e9, scores)
    attn = jax.nn.softmax(scores, axis=-1)
    out = jnp.einsum("nhqk,nhkd->nhqd", attn, v, precision=hp)
    out = out.transpose(0, 2, 1, 3).reshape(N, Lq, d_model)
    return jnp.dot(out, params["wo"], precision=hp) + params["bo"], attn


if __name__ == "__main__":
    N, Lq, Lk, d_model, h = 2, 8, 8, 32, 4

    root = jax.random.PRNGKey(0)
    keys = jax.random.split(root, 12)
    bound = 1.0 / math.sqrt(d_model)

    def init_linear(kw, kb):
        w = jax.random.uniform(kw, (d_model, d_model),
                               minval=-bound, maxval=bound, dtype=jnp.float32)
        b = jax.random.uniform(kb, (d_model,),
                               minval=-bound, maxval=bound, dtype=jnp.float32)
        return w, b

    wq, bq = init_linear(keys[0], keys[1])
    wk, bk = init_linear(keys[2], keys[3])
    wv, bv = init_linear(keys[4], keys[5])
    wo, bo = init_linear(keys[6], keys[7])
    params = dict(wq=wq, bq=bq, wk=wk, bk=bk, wv=wv, bv=bv, wo=wo, bo=bo)

    query = jax.random.normal(keys[8], (N, Lq, d_model), dtype=jnp.float32)
    key_t = jax.random.normal(keys[9], (N, Lk, d_model), dtype=jnp.float32)
    value = jax.random.normal(keys[10], (N, Lk, d_model), dtype=jnp.float32)

    # (N, 1, Lk) padding-style mask: batch 1 masks out the last two key slots.
    mask = jnp.ones((N, 1, Lk), dtype=jnp.float32)
    mask = mask.at[1, 0, Lk - 2:].set(0.0)

    out, attn_w = multi_headed_attention(query, key_t, value, params, h=h, mask=mask)
    out = jax.block_until_ready(out)
    attn_w = jax.block_until_ready(attn_w)

    ref_out, ref_attn = _reference_mha(query, key_t, value, params, h=h, mask=mask)

    assert out.shape == (N, Lq, d_model)
    assert attn_w.shape == (N, h, Lq, Lk)
    assert jnp.allclose(out, ref_out, atol=2e-3, rtol=2e-3), \
        float(jnp.max(jnp.abs(out - ref_out)))
    assert jnp.allclose(attn_w, ref_attn, atol=2e-3, rtol=2e-3)

    print("KERNEL_OK")
</pallas_src>

<mosaic_0001>
module attributes {stable_mosaic.version = 11 : i64} {
  func.func @_linear_kernel(%arg0: i32, %arg1: memref<16x32xf32, #tpu.memory_space<vmem>>, %arg2: memref<32x32xf32, #tpu.memory_space<vmem>>, %arg3: memref<1x32xf32, #tpu.memory_space<vmem>>, %arg4: memref<16x32xf32, #tpu.memory_space<vmem>>) attributes {dimension_semantics = [#tpu.dimension_semantics<parallel>], iteration_bounds = array<i64: 1>, scalar_prefetch = 0 : i64, scratch_operands = 0 : i64, tpu.core_type = #tpu.core_type<tc>, window_params = [{transform_indices = @transform_0, window_bounds = array<i64: 16, 32>}, {pipeline_mode = #tpu.pipeline_mode<synchronous>, transform_indices = @transform_1, window_bounds = array<i64: 32, 32>}, {pipeline_mode = #tpu.pipeline_mode<synchronous>, transform_indices = @transform_2, window_bounds = array<i64: 1, 32>}, {transform_indices = @transform_3, window_bounds = array<i64: 16, 32>}]} {
    %c0 = arith.constant 0 : index
    %c0_0 = arith.constant 0 : index
    %0 = vector.load %arg1[%c0, %c0_0] : memref<16x32xf32, #tpu.memory_space<vmem>>, vector<16x32xf32>
    %c0_1 = arith.constant 0 : index
    %c0_2 = arith.constant 0 : index
    %1 = vector.load %arg2[%c0_1, %c0_2] : memref<32x32xf32, #tpu.memory_space<vmem>>, vector<32x32xf32>
    %cst = arith.constant dense<0.000000e+00> : vector<16x32xf32>
    %2 = tpu.matmul %0, %1, %cst {dimension_numbers = #tpu.dot_dimension_numbers<[1], [0], [0], [1], [0, 0, 1, 1], [], []>} : vector<16x32xf32>, vector<32x32xf32>, vector<16x32xf32> -> vector<16x32xf32>
    %c0_3 = arith.constant 0 : index
    %c0_4 = arith.constant 0 : index
    %3 = vector.load %arg3[%c0_3, %c0_4] : memref<1x32xf32, #tpu.memory_space<vmem>>, vector<1x32xf32>
    %4 = vector.broadcast %3 : vector<1x32xf32> to vector<16x32xf32>
    %5 = arith.addf %2, %4 : vector<16x32xf32>
    %c0_5 = arith.constant 0 : index
    %c0_6 = arith.constant 0 : index
    %6 = vector.load %arg4[%c0_5, %c0_6] : memref<16x32xf32, #tpu.memory_space<vmem>>, vector<16x32xf32>
    tpu.vector_store %arg4[%c0_5, %c0_6], %5 {strides = array<i32>} : memref<16x32xf32, #tpu.memory_space<vmem>>, vector<16x32xf32>,
    return
  }
  func.func @transform_0(%arg0: i32) -> (i32, i32) {
    %c0_i32 = arith.constant 0 : i32
    %c0_i32_0 = arith.constant 0 : i32
    return %arg0, %c0_i32 : i32, i32
  }
  func.func @transform_1(%arg0: i32) -> (i32, i32) {
    %c0_i32 = arith.constant 0 : i32
    %c0_i32_0 = arith.constant 0 : i32
    %c0_i32_1 = arith.constant 0 : i32
    return %c0_i32, %c0_i32_0 : i32, i32
  }
  func.func @transform_2(%arg0: i32) -> (i32, i32) {
    %c0_i32 = arith.constant 0 : i32
    %c0_i32_0 = arith.constant 0 : i32
    %c0_i32_1 = arith.constant 0 : i32
    return %c0_i32, %c0_i32_0 : i32, i32
  }
  func.func @transform_3(%arg0: i32) -> (i32, i32) {
    %c0_i32 = arith.constant 0 : i32
    %c0_i32_0 = arith.constant 0 : i32
    return %arg0, %c0_i32 : i32, i32
  }
}

</mosaic_0001>

<llo_original>
// kernel: tpu_custom_call.1
$region0: #{tpu_custom_call.1}
  #allocation0 [shape = 'u32[]', space=smem, size = 0x4, offset = 0x4, fixed_abs, tag = 'smem constant byte address 0x4 - core index']
  #allocation1 [shape = 'u32[144,128]{1,0:T(1,128)}', space=vmem, size = 0x12000, scoped, tag = 'internal scratch']
  %s0 = inlined_call_operand.hbm [shape: f32[16,32], index: 0, kind: input, shape index: {}]
  %s1 = inlined_call_operand.hbm [shape: f32[32,32], index: 1, kind: input, shape index: {}]
  %s2 = inlined_call_operand.vmem [shape: f32[1,32], index: 2, kind: input, shape index: {}]
  %s3 = inlined_call_operand.hbm [shape: f32[16,32], index: 3, kind: output, shape index: {}]
  %s4 = sld [smem:[#allocation0]]
  $region30: #{tpu_custom_call.1} parent=0
    _
  %s6 = ssub.s32 1, %s4
  %s7 = scalar_select 0, %s6, %s4
  $region1: #{tpu_custom_call.1} parent=0
    #allocation2 [shape = 'u8[8192]{0}', space=vmem, size = 0x2000, scoped, tag = 'input window, operand 0, single buffered']
    #allocation3 [shape = 's32[1]{0}', space=sflag, size = 0x4, scoped, tag = 'scoped memory for tpu_custom_call.1']
    #allocation4 [shape = 's32[1]{0}', space=sflag, size = 0x4, scoped, tag = 'scoped memory for tpu_custom_call.1']
    #allocation5 [shape = 'u8[16384]{0}', space=vmem, size = 0x4000, scoped, tag = 'input window, operand 1, single buffered']
    #allocation6 [shape = 's32[1]{0}', space=sflag, size = 0x4, scoped, tag = 'scoped memory for tpu_custom_call.1']
    #allocation7 [shape = 'u8[8192]{0}', space=vmem, size = 0x2000, scoped, tag = 'output window, operand 0, single buffered']
    %8 = vsyncpa [#allocation3], 0
    %9 = vsyncpa [#allocation6], 0
    %10 = vsyncpa [#allocation4], 0
    // Predicated region
    $region2: #{tpu_custom_call.1} parent=1 // pred_check
      _
    $region3: #{tpu_custom_call.1} parent=1 // pred_check_branch
      %12 = sbr.rel (0) target = $region5
    $region4: #{tpu_custom_call.1} parent=1 // pred_region
      %s14 = ssub.s32 256, 256
      %15 = vsyncadd [#allocation3], %s14
      %s16 = sshll.u32 [#allocation2], 4
      %s17 = int_to_ptr.vmem [resolvable:$true] %s16
      %22 = dma.hbm_to_vmem [thread:$0]  %s0, 256, %s17, [#allocation3], 128, 128, 8
    $region5: #{tpu_custom_call.1} parent=1 // pred_fallthru
      _
    // Predicated region
    $region6: #{tpu_custom_call.1} parent=1 // pred_check
      _
    $region7: #{tpu_custom_call.1} parent=1 // pred_check_branch
      %24 = sbr.rel (0) target = $region9
    $region8: #{tpu_custom_call.1} parent=1 // pred_region
      %s26 = ssub.s32 512, 512
      %27 = vsyncadd [#allocation6], %s26
      %s28 = sshll.u32 [#allocation5], 4
      %s29 = int_to_ptr.vmem [resolvable:$true] %s28
      %34 = dma.hbm_to_vmem [thread:$0]  %s1, 512, %s29, [#allocation6], 128, 128, 8
    $region9: #{tpu_custom_call.1} parent=1 // pred_fallthru
      _
    // Predicated region
    $region10: #{tpu_custom_call.1} parent=1 // pred_check
      _
    $region11: #{tpu_custom_call.1} parent=1 // pred_check_branch
      %36 = sbr.rel (0) target = $region13
    $region12: #{tpu_custom_call.1} parent=1 // pred_region
      _
    $region13: #{tpu_custom_call.1} parent=1 // pred_fallthru
      _
    // Predicated region
    $region14: #{tpu_custom_call.1} parent=1 // pred_check
      _
    $region15: #{tpu_custom_call.1} parent=1 // pred_check_branch
      %38 = sbr.rel (0) target = $region17
    $region16: #{tpu_custom_call.1} parent=1 // pred_region
      %39 = dma.done [#allocation3], 256
    $region17: #{tpu_custom_call.1} parent=1 // pred_fallthru
      _
    // Predicated region
    $region18: #{tpu_custom_call.1} parent=1 // pred_check
      _
    $region19: #{tpu_custom_call.1} parent=1 // pred_check_branch
      %41 = sbr.rel (0) target = $region21
    $region20: #{tpu_custom_call.1} parent=1 // pred_region
      %42 = dma.done [#allocation6], 512
    $region21: #{tpu_custom_call.1} parent=1 // pred_fallthru
      _
    %v43 = vld [vmem:[#allocation2] sm:$0xff]
    %v44 = vld [vmem:[#allocation2 + $0x8] sm:$0xff]
    %v45 = vld [vmem:[#allocation5] sm:$0xff]
    %v46 = vld [vmem:[#allocation5 + $0x8] sm:$0xff]
    %v47 = vld [vmem:[#allocation5 + $0x10] sm:$0xff]
    %v48 = vld [vmem:[#allocation5 + $0x18] sm:$0xff]
    %v49 = vld [vmem:[%s2] sm:$0x1]
    %v51 = vlaneseq
    %v52 = vshrl.u32 %v51, 7
    %v53 = vsub.s32 0, %v52
    %v54 = vrot.slane %v49, %v53
    %vm56 = vcmask 261120
    %v58 = vsel %vm56, %v43, 0
    %v61 = vsel %vm56, %v44, 0
    %63 = vmatprep.subr.mxu0 0.0
    %64 = vmatpush1.msra.mxu0 %v45
    %65 = vmatprep.subr.mxu0 0.0
    %66 = vmatpush1.msra.mxu0 %v46
    %67 = vmatprep.subr.mxu0 0.0
    %68 = vmatpush1.msra.mxu0 %v47
    %69 = vmatprep.subr.mxu0 0.0
    %70 = vmatpush1.msra.mxu0 %v48
    %71 = vmatprep.subr.mxu0 0.0
    %72 = vmatpush1.msra.mxu0 0.0
    %73 = vmatprep.subr.mxu0 0.0
    %74 = vmatpush1.msra.mxu0 0.0
    %75 = vmatprep.subr.mxu0 0.0
    %76 = vmatpush1.msra.mxu0 0.0
    %77 = vmatprep.subr.mxu0 0.0
    %78 = vmatpush1.msra.mxu0 0.0
    %79 = vmatprep.subr.mxu0 0.0
    %80 = vmatpush1.msra.mxu0 0.0
    %81 = vmatprep.subr.mxu0 0.0
    %82 = vmatpush1.msra.mxu0 0.0
    %83 = vmatprep.subr.mxu0 0.0
    %84 = vmatpush1.msra.mxu0 0.0
    %85 = vmatprep.subr.mxu0 0.0
    %86 = vmatpush1.msra.mxu0 0.0
    %87 = vmatprep.subr.mxu0 0.0
    %88 = vmatpush1.msra.mxu0 0.0
    %89 = vmatprep.subr.mxu0 0.0
    %90 = vmatpush1.msra.mxu0 0.0
    %91 = vmatprep.subr.mxu0 0.0
    %92 = vmatpush1.msra.mxu0 0.0
    %93 = vmatprep.subr.mxu0 0.0
    %94 = vmatpush1.msra.mxu0 0.0
    %95 = vmatprep.subr.mxu0 0.0
    %96 = vmatpush1.msra.mxu0 0.0
    %97 = vmatprep.subr.mxu0 0.0
    %98 = vmatpush1.msra.mxu0 0.0
    %99 = vmatprep.subr.mxu0 0.0
    %100 = vmatpush1.msra.mxu0 0.0
    %101 = vmatprep.subr.mxu0 0.0
    %102 = vmatpush1.msra.mxu0 0.0
    %103 = vmatprep.subr.mxu0 0.0
    %104 = vmatpush1.msra.mxu0 0.0
    %105 = vmatprep.subr.mxu0 0.0
    %106 = vmatpush1.msra.mxu0 0.0
    %107 = vmatprep.subr.mxu0 0.0
    %108 = vmatpush1.msra.mxu0 0.0
    %109 = vmatprep.subr.mxu0 0.0
    %110 = vmatpush1.msra.mxu0 0.0
    %111 = vmatprep.subr.mxu0 0.0
    %112 = vmatpush1.msra.mxu0 0.0
    %113 = vmatprep.subr.mxu0 0.0
    %114 = vmatpush1.msra.mxu0 0.0
    %115 = vmatprep.subr.mxu0 0.0
    %116 = vmatpush1.msra.mxu0 0.0
    %117 = vmatprep.subr.mxu0 0.0
    %118 = vmatpush1.msra.mxu0 0.0
    %119 = vmatprep.subr.mxu0 0.0
    %120 = vmatpush1.msra.mxu0 0.0
    %121 = vmatprep.subr.mxu0 0.0
    %122 = vmatpush1.msra.mxu0 0.0
    %123 = vmatprep.subr.mxu0 0.0
    %124 = vmatpush1.msra.mxu0 0.0
    %125 = vmatprep.subr.mxu0 0.0
    %126 = vmatpush1.msra.mxu0 0.0
    %127 = vmatprep.mubr.f32.mxu0 0.0
    %128 = vmatmul.mubr.f32.gmra.mrb[0].mxu0 %v58
    %v129 = vpop.f32.mrb[0].mxu0
    %v130 = vadd.f32 %v54, %v129
    %v131 = vpop.f32.mrb[0].mxu0
    %132 = vmatprep.mubr.f32.mxu0 0.0
    %133 = vmatmul.mubr.f32.gmra.mrb[0].mxu0 %v61
    %v134 = vpop.f32.mrb[0].mxu0
    %v135 = vadd.f32 %v54, %v134
    %v136 = vpop.f32.mrb[0].mxu0
    %137 = vdwg.mxu0
    %138 = vst.msk [vmem:[#allocation7] sm:$0xff] %vm56, %v130
    %139 = vst.msk [vmem:[#allocation7 + $0x8] sm:$0xff] %vm56, %v135
    // Predicated region
    $region22: #{tpu_custom_call.1} parent=1 // pred_check
      _
    $region23: #{tpu_custom_call.1} parent=1 // pred_check_branch
      %141 = sbr.rel (0) target = $region25
    $region24: #{tpu_custom_call.1} parent=1 // pred_region
      %s143 = ssub.s32 256, 256
      %144 = vsyncadd [#allocation4], %s143
      %s145 = sshll.u32 [#allocation7], 4
      %s146 = int_to_ptr.vmem [resolvable:$true] %s145
      %151 = dma.vmem_to_hbm [thread:$0]  %s146, 256, %s3, [#allocation4], 128, 128, 8
    $region25: #{tpu_custom_call.1} parent=1 // pred_fallthru
      _
    // Predicated region
    $region26: #{tpu_custom_call.1} parent=1 // pred_check
      _
    $region27: #{tpu_custom_call.1} parent=1 // pred_check_branch
      %153 = sbr.rel (0) target = $region29
    $region28: #{tpu_custom_call.1} parent=1 // pred_region
      %154 = dma.done [#allocation4], 256
    $region29: #{tpu_custom_call.1} parent=1 // pred_fallthru
      _
    %155 = vsyncpa [#allocation3], 1
    %156 = vsyncpa [#allocation6], 1
    %157 = vsyncpa [#allocation4], 1

</llo_original>
